<compile_context>
chip_gen: v6e
topology: v6e:2x2x1
jax: 0.10.0
libtpu: 0.0.40
codegen_flags: <defaults>
</compile_context>

<pallas_src>
import inspect

import jax
import jax.numpy as jnp
from jax.experimental import pallas as pl
from jax.experimental.pallas import tpu as pltpu

_MIB = 1024 * 1024
_SCRATCH_MARGIN = 2 * _MIB  # Mosaic internal scratch / un-modelled temporaries


# ---------------------------------------------------------------------------
# Kernel
# ---------------------------------------------------------------------------
def ffn_kernel(x_ref, w1_ref, w2_ref, o_ref, acc_ref):
    """One (tm, d_model) row tile x one tk-chunk of d_ff.

    Grid = (row tiles, d_ff chunks). The d_ff axis is a reduction: acc_ref
    holds residual + partial second-matmul result in f32; the LayerNorm
    epilogue runs on the last chunk.
    """
    k = pl.program_id(1)
    x = x_ref[...]

    @pl.when(k == 0)
    def _():
        # Seed the accumulator with the residual: removes a tm x d_model f32
        # add (and one extra acc read) from the epilogue.
        acc_ref[...] = x.astype(jnp.float32)

    # Matmuls in the operand dtype (no upcast before the MXU); f32 accumulate.
    h = jnp.dot(x, w1_ref[...], preferred_element_type=jnp.float32)
    h = jnp.maximum(h, 0.0)
    acc_ref[...] += jnp.dot(h.astype(w2_ref.dtype), w2_ref[...],
                            preferred_element_type=jnp.float32)

    @pl.when(k == pl.num_programs(1) - 1)
    def _():
        # LayerNorm(d_model): gamma=1, beta=0, eps=1e-5 (fresh nn.LayerNorm
        # in the PyTorch forward), f32 math. acc already holds y = ffn(x) + x.
        y = acc_ref[...]
        mean = jnp.mean(y, axis=-1, keepdims=True)
        ctr = y - mean
        var = jnp.mean(ctr * ctr, axis=-1, keepdims=True)
        o_ref[...] = (ctr * jax.lax.rsqrt(var + 1e-5)).astype(o_ref.dtype)


# ---------------------------------------------------------------------------
# Planning helpers
# ---------------------------------------------------------------------------
def _round_up(x, m):
    return ((x + m - 1) // m) * m


def _vmem_budget_bytes():
    """Generation-aware usable VMEM budget and physical capacity.

    ~75% of capacity usable: ~48 MiB on v7x (64 MiB/TC), ~96 MiB on v5e/v6e
    (128 MiB) -- headroom for compiler scratch and allocation slop.
    """
    cap = 128 * _MIB
    try:
        cap = int(getattr(pltpu.get_tpu_info(), "vmem_capacity_bytes", cap))
    except Exception:  # interpret mode / very old jax: assume 128 MiB part
        pass
    return (cap * 3) // 4, cap


def _footprint_bytes(tm, tk, d_model, x_isz, w_isz, out_isz, weight_buffers):
    """Estimated VMEM bytes for one pipelined step (incl. h intermediate)."""
    weights = weight_buffers * 2 * d_model * tk * w_isz   # w1 chunk + w2 chunk
    x_tile = 2 * tm * d_model * x_isz                     # double-buffered
    out_tile = 2 * tm * d_model * out_isz                 # double-buffered
    acc = tm * d_model * 4                                # f32 accumulator
    h = tm * tk * 4                                       # f32 ReLU intermediate
    return weights + x_tile + out_tile + acc + h + _SCRATCH_MARGIN


def _supports_pipeline_mode():
    try:
        return (hasattr(pl, "Buffered")
                and "pipeline_mode" in inspect.signature(pl.BlockSpec).parameters)
    except (TypeError, ValueError):
        return False


def _weight_spec(shape, index_map, single_buffer):
    if single_buffer and _supports_pipeline_mode():
        # Grid-invariant weight block: one VMEM buffer is enough.
        return pl.BlockSpec(shape, index_map, pipeline_mode=pl.Buffered(1))
    return pl.BlockSpec(shape, index_map)


def _plan_tiles(m_rows, d_model, d_ff, x_isz, w_isz, out_isz, budget):
    """Returns (tm, tk, single_buffer_weights)."""
    tm_full = _round_up(max(m_rows, 8), 16)

    # 1) Weight-resident path: tk == d_ff, weights DMA'd from HBM exactly once.
    #    Prefer default double-buffered specs when they fit (second buffer is
    #    idle but harmless); fall back to Buffered(1) only when needed to fit.
    for tm in (256, 128):
        tm = min(tm, tm_full)
        for wbuf, single in ((2, False), (1, True)):
            if single and not _supports_pipeline_mode():
                continue
            if _footprint_bytes(tm, d_ff, d_model, x_isz, w_isz, out_isz,
                                wbuf) <= budget:
                return tm, d_ff, single
        if tm == tm_full:
            break

    # 2) Streaming path: weights re-fetched per row tile; amortize with a
    #    larger tm and the biggest 128-multiple d_ff chunk that fits.
    tm_cands = [t for t in (1024, 512, 256, 128) if t <= tm_full] or [tm_full]
    d_ff_128 = _round_up(d_ff, 128)
    tk_cands = [t for t in (2048, 1024, 512, 256, 128) if t <= d_ff_128] or [d_ff_128]
    for tm in tm_cands:
        for tk in tk_cands:
            if _footprint_bytes(tm, tk, d_model, x_isz, w_isz, out_isz,
                                2) <= budget:
                return tm, tk, False
    # Last resort: smallest tiles even if over the soft budget.
    return tm_cands[-1], tk_cands[-1], False


# ---------------------------------------------------------------------------
# Wrapper
# ---------------------------------------------------------------------------
def poswise_ffn(x, w1, w2, *, weight_dtype=None):
    """x: [..., d_model]; w1: [d_model, d_ff]; w2: [d_ff, d_model].

    weight_dtype: optionally cast weights (e.g. jnp.bfloat16) to halve weight
    HBM/VMEM bytes; off by default to match the f32 PyTorch reference.
    """
    orig_shape = x.shape
    d_model = x.shape[-1]
    d_ff = w1.shape[1]
    assert w1.shape == (d_model, d_ff) and w2.shape == (d_ff, d_model)

    if weight_dtype is not None:
        w1 = w1.astype(weight_dtype)
        w2 = w2.astype(weight_dtype)

    x2d = x.reshape(-1, d_model)
    m_rows = x2d.shape[0]

    budget, vmem_cap = _vmem_budget_bytes()
    tm, tk, single_buffer_weights = _plan_tiles(
        m_rows, d_model, d_ff,
        x2d.dtype.itemsize, w1.dtype.itemsize, x.dtype.itemsize, budget)

    # Pad rows to a tile multiple (padded zero rows LayerNorm to zeros).
    m_pad = _round_up(m_rows, tm)
    if m_pad != m_rows:
        x2d = jnp.pad(x2d, ((0, m_pad - m_rows), (0, 0)))

    # Pad d_ff to a chunk multiple when streaming (zero w1 columns / w2 rows
    # contribute exactly 0 through ReLU and the second matmul).
    d_ff_pad = _round_up(d_ff, tk)
    if d_ff_pad != d_ff:
        w1 = jnp.pad(w1, ((0, 0), (0, d_ff_pad - d_ff)))
        w2 = jnp.pad(w2, ((0, d_ff_pad - d_ff), (0, 0)))

    nk = d_ff_pad // tk
    num_row_tiles = m_pad // tm
    grid = (num_row_tiles, nk)

    # Serpentine k order when chunked: last chunk of row tile i == first chunk
    # of row tile i+1, saving one chunk re-fetch per row tile.
    if nk > 1:
        def _kk(i, k):
            return k + (i % 2) * (nk - 1 - 2 * k)
        w1_map = lambda i, k: (0, _kk(i, k))
        w2_map = lambda i, k: (_kk(i, k), 0)
    else:
        w1_map = lambda i, k: (0, 0)
        w2_map = lambda i, k: (0, 0)

    # Advisory cost estimate. When streaming (nk > 1) the weights are re-read
    # from HBM once per row tile; count that so XLA sees the true HBM demand.
    weight_bytes = w1.size * w1.dtype.itemsize + w2.size * w2.dtype.itemsize
    weight_traffic = weight_bytes * (num_row_tiles if nk > 1 else 1)
    flops = 4 * m_pad * d_model * d_ff_pad  # two matmuls, 2*M*D*F each
    bytes_accessed = (x2d.size * x2d.dtype.itemsize
                      + weight_traffic
                      + m_pad * d_model * x.dtype.itemsize)
    cost = pl.CostEstimate(flops=int(flops), transcendentals=int(m_pad),
                           bytes_accessed=int(bytes_accessed))

    footprint = _footprint_bytes(
        tm, tk, d_model, x2d.dtype.itemsize, w1.dtype.itemsize,
        x.dtype.itemsize, 1 if single_buffer_weights else 2)
    vmem_limit = int(min(max(footprint + 4 * _MIB, 32 * _MIB),
                         (vmem_cap * 9) // 10))

    out2d = pl.pallas_call(
        ffn_kernel,
        out_shape=jax.ShapeDtypeStruct((m_pad, d_model), x.dtype),
        grid_spec=pltpu.PrefetchScalarGridSpec(
            num_scalar_prefetch=0,
            grid=grid,
            in_specs=[
                pl.BlockSpec((tm, d_model), lambda i, k: (i, 0)),
                _weight_spec((d_model, tk), w1_map, single_buffer_weights),
                _weight_spec((tk, d_model), w2_map, single_buffer_weights),
            ],
            out_specs=pl.BlockSpec((tm, d_model), lambda i, k: (i, 0)),
            scratch_shapes=[pltpu.VMEM((tm, d_model), jnp.float32)],
        ),
        compiler_params=pltpu.CompilerParams(
            dimension_semantics=("parallel", "arbitrary"),
            vmem_limit_bytes=vmem_limit,
        ),
        cost_estimate=cost,
    )(x2d, w1, w2)

    if m_pad != m_rows:
        out2d = out2d[:m_rows]
    return out2d.reshape(orig_shape)


# ---------------------------------------------------------------------------
# Reference + test
# ---------------------------------------------------------------------------
def reference_ffn(x, w1, w2):
    h = jnp.maximum(x @ w1, 0.0)
    y = h @ w2 + x
    mean = jnp.mean(y, axis=-1, keepdims=True)
    var = jnp.mean((y - mean) ** 2, axis=-1, keepdims=True)
    return (y - mean) / jnp.sqrt(var + 1e-5)


if __name__ == "__main__":
    B, S, d_model, d_ff = 2, 8, 32, 64

    key = jax.random.PRNGKey(0)
    kx, k1, k2 = jax.random.split(key, 3)

    x = jax.random.normal(kx, (B, S, d_model), dtype=jnp.float32)
    # nn.Linear default init ~ U(-1/sqrt(fan_in), 1/sqrt(fan_in)); deterministic here.
    w1 = jax.random.uniform(k1, (d_model, d_ff), dtype=jnp.float32,
                            minval=-1.0 / (d_model ** 0.5),
                            maxval=1.0 / (d_model ** 0.5))
    w2 = jax.random.uniform(k2, (d_ff, d_model), dtype=jnp.float32,
                            minval=-1.0 / (d_ff ** 0.5),
                            maxval=1.0 / (d_ff ** 0.5))

    out = jax.block_until_ready(poswise_ffn(x, w1, w2))
    ref = reference_ffn(x, w1, w2)

    assert out.shape == (B, S, d_model)
    assert jnp.allclose(out, ref, atol=1e-4, rtol=1e-4)
    print("KERNEL_OK")
</pallas_src>

<mosaic_0001>
module attributes {stable_mosaic.version = 11 : i64} {
  func.func @ffn_kernel(%arg0: i32, %arg1: i32, %arg2: memref<16x32xf32, #tpu.memory_space<vmem>>, %arg3: memref<32x64xf32, #tpu.memory_space<vmem>>, %arg4: memref<64x32xf32, #tpu.memory_space<vmem>>, %arg5: memref<16x32xf32, #tpu.memory_space<vmem>>, %arg6: memref<16x32xf32, #tpu.memory_space<vmem>>) attributes {dimension_semantics = [#tpu.dimension_semantics<parallel>, #tpu.dimension_semantics<arbitrary>], iteration_bounds = array<i64: 1, 1>, scalar_prefetch = 0 : i64, scratch_operands = 1 : i64, tpu.core_type = #tpu.core_type<tc>, window_params = [{transform_indices = @transform_0, window_bounds = array<i64: 16, 32>}, {pipeline_mode = #tpu.pipeline_mode<synchronous>, transform_indices = @transform_1, window_bounds = array<i64: 32, 64>}, {pipeline_mode = #tpu.pipeline_mode<synchronous>, transform_indices = @transform_2, window_bounds = array<i64: 64, 32>}, {transform_indices = @transform_3, window_bounds = array<i64: 16, 32>}]} {
    %c0 = arith.constant 0 : index
    %c0_0 = arith.constant 0 : index
    %0 = vector.load %arg2[%c0, %c0_0] : memref<16x32xf32, #tpu.memory_space<vmem>>, vector<16x32xf32>
    %c0_i32 = arith.constant 0 : i32
    %1 = arith.cmpi eq, %arg1, %c0_i32 : i32
    %2 = arith.extui %1 : i1 to i32
    %c0_i32_1 = arith.constant 0 : i32
    %3 = arith.cmpi ne, %2, %c0_i32_1 : i32
    scf.if %3 {
      %c0_14 = arith.constant 0 : index
      %c0_15 = arith.constant 0 : index
      %16 = vector.load %arg6[%c0_14, %c0_15] : memref<16x32xf32, #tpu.memory_space<vmem>>, vector<16x32xf32>
      tpu.vector_store %arg6[%c0_14, %c0_15], %0 {strides = array<i32>} : memref<16x32xf32, #tpu.memory_space<vmem>>, vector<16x32xf32>,
    } else {
    }
    %c0_2 = arith.constant 0 : index
    %c0_3 = arith.constant 0 : index
    %4 = vector.load %arg3[%c0_2, %c0_3] : memref<32x64xf32, #tpu.memory_space<vmem>>, vector<32x64xf32>
    %cst = arith.constant dense<0.000000e+00> : vector<16x64xf32>
    %5 = tpu.matmul %0, %4, %cst {dimension_numbers = #tpu.dot_dimension_numbers<[1], [0], [0], [1], [0, 0, 1, 1], [], []>} : vector<16x32xf32>, vector<32x64xf32>, vector<16x64xf32> -> vector<16x64xf32>
    %cst_4 = arith.constant 0.000000e+00 : f32
    %6 = vector.broadcast %cst_4 : f32 to vector<16x64xf32>
    %7 = arith.maximumf %5, %6 : vector<16x64xf32>
    %c0_5 = arith.constant 0 : index
    %c0_6 = arith.constant 0 : index
    %8 = vector.load %arg6[%c0_5, %c0_6] : memref<16x32xf32, #tpu.memory_space<vmem>>, vector<16x32xf32>
    %c0_7 = arith.constant 0 : index
    %c0_8 = arith.constant 0 : index
    %9 = vector.load %arg4[%c0_7, %c0_8] : memref<64x32xf32, #tpu.memory_space<vmem>>, vector<64x32xf32>
    %cst_9 = arith.constant dense<0.000000e+00> : vector<16x32xf32>
    %10 = tpu.matmul %7, %9, %cst_9 {dimension_numbers = #tpu.dot_dimension_numbers<[1], [0], [0], [1], [0, 0, 1, 1], [], []>} : vector<16x64xf32>, vector<64x32xf32>, vector<16x32xf32> -> vector<16x32xf32>
    %11 = arith.addf %8, %10 : vector<16x32xf32>
    %c0_10 = arith.constant 0 : index
    %c0_11 = arith.constant 0 : index
    %12 = vector.load %arg6[%c0_10, %c0_11] : memref<16x32xf32, #tpu.memory_space<vmem>>, vector<16x32xf32>
    tpu.vector_store %arg6[%c0_10, %c0_11], %11 {strides = array<i32>} : memref<16x32xf32, #tpu.memory_space<vmem>>, vector<16x32xf32>,
    %c0_i32_12 = arith.constant 0 : i32
    %13 = arith.cmpi eq, %arg1, %c0_i32_12 : i32
    %14 = arith.extui %13 : i1 to i32
    %c0_i32_13 = arith.constant 0 : i32
    %15 = arith.cmpi ne, %14, %c0_i32_13 : i32
    scf.if %15 {
      %c0_14 = arith.constant 0 : index
      %c0_15 = arith.constant 0 : index
      %16 = vector.load %arg6[%c0_14, %c0_15] : memref<16x32xf32, #tpu.memory_space<vmem>>, vector<16x32xf32>
      %cst_16 = arith.constant dense<0.000000e+00> : vector<16xf32>
      %17 = vector.multi_reduction <add>, %16, %cst_16 [1] : vector<16x32xf32> to vector<16xf32>
      %18 = vector.shape_cast %17 : vector<16xf32> to vector<16x1xf32>
      %cst_17 = arith.constant 3.200000e+01 : f32
      %19 = vector.broadcast %cst_17 : f32 to vector<16x1xf32>
      %20 = arith.divf %18, %19 : vector<16x1xf32>
      %21 = vector.broadcast %20 : vector<16x1xf32> to vector<16x32xf32>
      %22 = arith.subf %16, %21 : vector<16x32xf32>
      %23 = arith.mulf %22, %22 : vector<16x32xf32>
      %cst_18 = arith.constant dense<0.000000e+00> : vector<16xf32>
      %24 = vector.multi_reduction <add>, %23, %cst_18 [1] : vector<16x32xf32> to vector<16xf32>
      %25 = vector.shape_cast %24 : vector<16xf32> to vector<16x1xf32>
      %cst_19 = arith.constant 3.200000e+01 : f32
      %26 = vector.broadcast %cst_19 : f32 to vector<16x1xf32>
      %27 = arith.divf %25, %26 : vector<16x1xf32>
      %cst_20 = arith.constant 9.99999974E-6 : f32
      %28 = vector.broadcast %cst_20 : f32 to vector<16x1xf32>
      %29 = arith.addf %27, %28 : vector<16x1xf32>
      %30 = math.rsqrt %29 : vector<16x1xf32>
      %31 = vector.broadcast %30 : vector<16x1xf32> to vector<16x32xf32>
      %32 = arith.mulf %22, %31 : vector<16x32xf32>
      %c0_21 = arith.constant 0 : index
      %c0_22 = arith.constant 0 : index
      %33 = vector.load %arg5[%c0_21, %c0_22] : memref<16x32xf32, #tpu.memory_space<vmem>>, vector<16x32xf32>
      tpu.vector_store %arg5[%c0_21, %c0_22], %32 {strides = array<i32>} : memref<16x32xf32, #tpu.memory_space<vmem>>, vector<16x32xf32>,
    } else {
    }
    return
  }
  func.func @transform_0(%arg0: i32, %arg1: i32) -> (i32, i32) {
    %c0_i32 = arith.constant 0 : i32
    %c0_i32_0 = arith.constant 0 : i32
    return %arg0, %c0_i32 : i32, i32
  }
  func.func @transform_1(%arg0: i32, %arg1: i32) -> (i32, i32) {
    %c0_i32 = arith.constant 0 : i32
    %c0_i32_0 = arith.constant 0 : i32
    %c0_i32_1 = arith.constant 0 : i32
    return %c0_i32, %c0_i32_0 : i32, i32
  }
  func.func @transform_2(%arg0: i32, %arg1: i32) -> (i32, i32) {
    %c0_i32 = arith.constant 0 : i32
    %c0_i32_0 = arith.constant 0 : i32
    %c0_i32_1 = arith.constant 0 : i32
    return %c0_i32, %c0_i32_0 : i32, i32
  }
  func.func @transform_3(%arg0: i32, %arg1: i32) -> (i32, i32) {
    %c0_i32 = arith.constant 0 : i32
    %c0_i32_0 = arith.constant 0 : i32
    return %arg0, %c0_i32 : i32, i32
  }
}

</mosaic_0001>

<llo_original>
// kernel: tpu_custom_call.1
$region0: #{tpu_custom_call.1}
  #allocation0 [shape = 'u32[]', space=smem, size = 0x4, offset = 0x4, fixed_abs, tag = 'smem constant byte address 0x4 - core index']
  #allocation1 [shape = 'u32[144,128]{1,0:T(1,128)}', space=vmem, size = 0x12000, scoped, tag = 'internal scratch']
  #allocation2 [shape = 'f32[16,32]{1,0:T(8,128)}', space=vmem, size = 0x2000, scoped, tag = 'scratch operand']
  %s0 = inlined_call_operand.vmem [shape: f32[16,32], index: 0, kind: input, shape index: {}]
  %s1 = inlined_call_operand.vmem [shape: f32[32,64], index: 1, kind: input, shape index: {}]
  %s2 = inlined_call_operand.vmem [shape: f32[64,32], index: 2, kind: input, shape index: {}]
  %s3 = inlined_call_operand.hbm [shape: f32[16,32], index: 3, kind: output, shape index: {}]
  %s4 = sld [smem:[#allocation0]]
  $region30: #{tpu_custom_call.1} parent=0
    _
  %s6 = ssub.s32 1, %s4
  %s7 = scalar_select 0, %s6, %s4
  $region1: #{tpu_custom_call.1} parent=0
    #allocation3 [shape = 'u8[8192]{0}', space=vmem, size = 0x2000, scoped, tag = 'output window, operand 0, single buffered']
    #allocation4 [shape = 's32[1]{0}', space=sflag, size = 0x4, scoped, tag = 'scoped memory for tpu_custom_call.1']
    %8 = vsyncpa [#allocation4], 0
    // Predicated region
    $region2: #{tpu_custom_call.1} parent=1 // pred_check
      _
    $region3: #{tpu_custom_call.1} parent=1 // pred_check_branch
      %10 = sbr.rel (0) target = $region5
    $region4: #{tpu_custom_call.1} parent=1 // pred_region
      _
    $region5: #{tpu_custom_call.1} parent=1 // pred_fallthru
      _
    // Predicated region
    $region6: #{tpu_custom_call.1} parent=1 // pred_check
      _
    $region7: #{tpu_custom_call.1} parent=1 // pred_check_branch
      %12 = sbr.rel (0) target = $region9
    $region8: #{tpu_custom_call.1} parent=1 // pred_region
      _
    $region9: #{tpu_custom_call.1} parent=1 // pred_fallthru
      _
    // Predicated region
    $region10: #{tpu_custom_call.1} parent=1 // pred_check
      _
    $region11: #{tpu_custom_call.1} parent=1 // pred_check_branch
      %14 = sbr.rel (0) target = $region13
    $region12: #{tpu_custom_call.1} parent=1 // pred_region
      _
    $region13: #{tpu_custom_call.1} parent=1 // pred_fallthru
      _
    %v15 = vld [vmem:[%s0] sm:$0xff]
    %v16 = vld [vmem:[%s0 + $0x8] sm:$0xff]
    %p17 = scmp.eq.s32.totalorder 0, 0
    // Predicated region
    $region14: #{tpu_custom_call.1} parent=1 // pred_check
      %p18 = pneg %p17
    $region15: #{tpu_custom_call.1} parent=1 // pred_check_branch
      %20 = sbr.rel (%p18) target = $region17
    $region16: #{tpu_custom_call.1} parent=1 // pred_region
      %vm21 = vcmask 261120
      %22 = vst.msk [vmem:[#allocation2] sm:$0xff] %vm21, %v15
      %23 = vst.msk [vmem:[#allocation2 + $0x8] sm:$0xff] %vm21, %v16
    $region17: #{tpu_custom_call.1} parent=1 // pred_fallthru
      _
    %v24 = vld [vmem:[%s1] sm:$0xff]
    %v25 = vld [vmem:[%s1 + $0x8] sm:$0xff]
    %v26 = vld [vmem:[%s1 + $0x10] sm:$0xff]
    %v27 = vld [vmem:[%s1 + $0x18] sm:$0xff]
    %vm28 = vcmask 261120
    %v30 = vsel %vm28, %v15, 0
    %v33 = vsel %vm28, %v16, 0
    %35 = vmatprep.subr.mxu0 0.0
    %36 = vmatpush1.msra.mxu0 0.0
    %37 = vmatprep.subr.mxu0 0.0
    %38 = vmatpush1.msra.mxu0 0.0
    %39 = vmatprep.subr.mxu0 0.0
    %40 = vmatpush1.msra.mxu0 0.0
    %41 = vmatprep.subr.mxu0 0.0
    %42 = vmatpush1.msra.mxu0 0.0
    %43 = vmatprep.subr.mxu0 0.0
    %44 = vmatpush1.msra.mxu0 0.0
    %45 = vmatprep.subr.mxu0 0.0
    %46 = vmatpush1.msra.mxu0 0.0
    %47 = vmatprep.subr.mxu0 0.0
    %48 = vmatpush1.msra.mxu0 0.0
    %49 = vmatprep.subr.mxu0 0.0
    %50 = vmatpush1.msra.mxu0 0.0
    %51 = vmatprep.subr.mxu0 0.0
    %52 = vmatpush1.msra.mxu0 0.0
    %53 = vmatprep.subr.mxu0 0.0
    %54 = vmatpush1.msra.mxu0 0.0
    %55 = vmatprep.subr.mxu0 0.0
    %56 = vmatpush1.msra.mxu0 0.0
    %57 = vmatprep.subr.mxu0 0.0
    %58 = vmatpush1.msra.mxu0 0.0
    %59 = vmatprep.subr.mxu0 0.0
    %60 = vmatpush1.msra.mxu0 %v27
    %61 = vmatprep.subr.mxu0 0.0
    %62 = vmatpush1.msra.mxu0 %v26
    %63 = vmatprep.subr.mxu0 0.0
    %64 = vmatpush1.msra.mxu0 %v25
    %65 = vmatprep.subr.mxu0 0.0
    %66 = vmatpush1.msra.mxu0 %v24
    %67 = vmatprep.subr.mxu0 0.0
    %68 = vmatpush2.msra.mxu0 0.0
    %69 = vmatprep.subr.mxu0 0.0
    %70 = vmatpush2.msra.mxu0 0.0
    %71 = vmatprep.subr.mxu0 0.0
    %72 = vmatpush2.msra.mxu0 0.0
    %73 = vmatprep.subr.mxu0 0.0
    %74 = vmatpush2.msra.mxu0 0.0
    %75 = vmatprep.subr.mxu0 0.0
    %76 = vmatpush2.msra.mxu0 0.0
    %77 = vmatprep.subr.mxu0 0.0
    %78 = vmatpush2.msra.mxu0 0.0
    %79 = vmatprep.subr.mxu0 0.0
    %80 = vmatpush2.msra.mxu0 0.0
    %81 = vmatprep.subr.mxu0 0.0
    %82 = vmatpush2.msra.mxu0 0.0
    %83 = vmatprep.subr.mxu0 0.0
    %84 = vmatpush2.msra.mxu0 0.0
    %85 = vmatprep.subr.mxu0 0.0
    %86 = vmatpush2.msra.mxu0 0.0
    %87 = vmatprep.subr.mxu0 0.0
    %88 = vmatpush2.msra.mxu0 0.0
    %89 = vmatprep.subr.mxu0 0.0
    %90 = vmatpush2.msra.mxu0 0.0
    %91 = vmatprep.subr.mxu0 0.0
    %92 = vmatpush2.msra.mxu0 0.0
    %93 = vmatprep.subr.mxu0 0.0
    %94 = vmatpush2.msra.mxu0 0.0
    %95 = vmatprep.subr.mxu0 0.0
    %96 = vmatpush2.msra.mxu0 0.0
    %97 = vmatprep.subr.mxu0 0.0
    %98 = vmatpush2.msra.mxu0 0.0
    %99 = vmatprep.mubr.f32.mxu0 0.0
    %100 = vmatmul.mubr.f32.gmra.mxu0 %v30
    %v101 = vpop.f32.mrf.mxu0
    %v102 = vadd.f32 0.0, %v101
    %v103 = vpop.f32.mrf.mxu0
    %104 = vmatprep.mubr.f32.mxu0 0.0
    %105 = vmatmul.mubr.f32.gmra.mxu0 %v33
    %v106 = vpop.f32.mrf.mxu0
    %v107 = vadd.f32 0.0, %v106
    %v108 = vpop.f32.mrf.mxu0
    %109 = vdwg.mxu0
    %v110 = vmax.f32 %v102, 0.0
    %v111 = vmax.f32 %v107, 0.0
    %v112 = vld [vmem:[#allocation2] sm:$0xff]
    %v113 = vld [vmem:[#allocation2 + $0x8] sm:$0xff]
    %v114 = vld [vmem:[%s2] sm:$0xff]
    %v115 = vld [vmem:[%s2 + $0x8] sm:$0xff]
    %v116 = vld [vmem:[%s2 + $0x10] sm:$0xff]
    %v117 = vld [vmem:[%s2 + $0x18] sm:$0xff]
    %v118 = vld [vmem:[%s2 + $0x20] sm:$0xff]
    %v119 = vld [vmem:[%s2 + $0x28] sm:$0xff]
    %v120 = vld [vmem:[%s2 + $0x30] sm:$0xff]
    %v121 = vld [vmem:[%s2 + $0x38] sm:$0xff]
    %vm122 = vcmask 523264
    %v124 = vsel %vm122, %v110, 0
    %v127 = vsel %vm122, %v111, 0
    %129 = vmatprep.subr.mxu0 0.0
    %130 = vmatpush1.msra.mxu0 0.0
    %131 = vmatprep.subr.mxu0 0.0
    %132 = vmatpush1.msra.mxu0 0.0
    %133 = vmatprep.subr.mxu0 0.0
    %134 = vmatpush1.msra.mxu0 0.0
    %135 = vmatprep.subr.mxu0 0.0
    %136 = vmatpush1.msra.mxu0 0.0
    %137 = vmatprep.subr.mxu0 0.0
    %138 = vmatpush1.msra.mxu0 0.0
    %139 = vmatprep.subr.mxu0 0.0
    %140 = vmatpush1.msra.mxu0 0.0
    %141 = vmatprep.subr.mxu0 0.0
    %142 = vmatpush1.msra.mxu0 0.0
    %143 = vmatprep.subr.mxu0 0.0
    %144 = vmatpush1.msra.mxu0 0.0
    %145 = vmatprep.subr.mxu0 0.0
    %146 = vmatpush1.msra.mxu0 %v121
    %147 = vmatprep.subr.mxu0 0.0
    %148 = vmatpush1.msra.mxu0 %v120
    %149 = vmatprep.subr.mxu0 0.0
    %150 = vmatpush1.msra.mxu0 %v119
    %151 = vmatprep.subr.mxu0 0.0
    %152 = vmatpush1.msra.mxu0 %v118
    %153 = vmatprep.subr.mxu0 0.0
    %154 = vmatpush1.msra.mxu0 %v117
    %155 = vmatprep.subr.mxu0 0.0
    %156 = vmatpush1.msra.mxu0 %v116
    %157 = vmatprep.subr.mxu0 0.0
    %158 = vmatpush1.msra.mxu0 %v115
    %159 = vmatprep.subr.mxu0 0.0
    %160 = vmatpush1.msra.mxu0 %v114
    %161 = vmatprep.subr.mxu0 0.0
    %162 = vmatpush2.msra.mxu0 0.0
    %163 = vmatprep.subr.mxu0 0.0
    %164 = vmatpush2.msra.mxu0 0.0
    %165 = vmatprep.subr.mxu0 0.0
    %166 = vmatpush2.msra.mxu0 0.0
    %167 = vmatprep.subr.mxu0 0.0
    %168 = vmatpush2.msra.mxu0 0.0
    %169 = vmatprep.subr.mxu0 0.0
    %170 = vmatpush2.msra.mxu0 0.0
    %171 = vmatprep.subr.mxu0 0.0
    %172 = vmatpush2.msra.mxu0 0.0
    %173 = vmatprep.subr.mxu0 0.0
    %174 = vmatpush2.msra.mxu0 0.0
    %175 = vmatprep.subr.mxu0 0.0
    %176 = vmatpush2.msra.mxu0 0.0
    %177 = vmatprep.subr.mxu0 0.0
    %178 = vmatpush2.msra.mxu0 0.0
    %179 = vmatprep.subr.mxu0 0.0
    %180 = vmatpush2.msra.mxu0 0.0
    %181 = vmatprep.subr.mxu0 0.0
    %182 = vmatpush2.msra.mxu0 0.0
    %183 = vmatprep.subr.mxu0 0.0
    %184 = vmatpush2.msra.mxu0 0.0
    %185 = vmatprep.subr.mxu0 0.0
    %186 = vmatpush2.msra.mxu0 0.0
    %187 = vmatprep.subr.mxu0 0.0
    %188 = vmatpush2.msra.mxu0 0.0
    %189 = vmatprep.subr.mxu0 0.0
    %190 = vmatpush2.msra.mxu0 0.0
    %191 = vmatprep.subr.mxu0 0.0
    %192 = vmatpush2.msra.mxu0 0.0
    %193 = vmatprep.mubr.f32.mxu0 0.0
    %194 = vmatmul.mubr.f32.gmra.mxu0 %v124
    %v195 = vpop.f32.mrf.mxu0
    %v196 = vadd.f32 0.0, %v195
    %v197 = vpop.f32.mrf.mxu0
    %198 = vmatprep.mubr.f32.mxu0 0.0
    %199 = vmatmul.mubr.f32.gmra.mxu0 %v127
    %v200 = vpop.f32.mrf.mxu0
    %v201 = vadd.f32 0.0, %v200
    %v202 = vpop.f32.mrf.mxu0
    %203 = vdwg.mxu0
    %v204 = vadd.f32 %v112, %v196
    %v205 = vadd.f32 %v113, %v201
    %206 = vst.msk [vmem:[#allocation2] sm:$0xff] %vm28, %v204
    %207 = vst.msk [vmem:[#allocation2 + $0x8] sm:$0xff] %vm28, %v205
    // Predicated region
    $region18: #{tpu_custom_call.1} parent=1 // pred_check
      %p208 = pneg %p17
    $region19: #{tpu_custom_call.1} parent=1 // pred_check_branch
      %210 = sbr.rel (%p208) target = $region21
    $region20: #{tpu_custom_call.1} parent=1 // pred_region
      %v211 = vld [vmem:[#allocation2] sm:$0xff]
      %v212 = vld [vmem:[#allocation2 + $0x8] sm:$0xff]
      %v213 = vsel %vm28, %v211, 0.0
      %214 = vadd.xlane.f32.xlu0 %v213
      %v215 = vpop.xlane.xlu0 %214
      %v216 = vsel %vm28, %v212, 0.0
      %217 = vadd.xlane.f32.xlu0 %v216
      %v218 = vpop.xlane.xlu0 %217
      %v219 = vrcp.pop 32.0
      %v220 = vmul.f32 %v215, %v219
      %v221 = vmul.f32 %v218, %v219
      %v222 = vsub.f32 %v211, %v220
      %v223 = vsub.f32 %v212, %v221
      %v224 = vmul.f32 %v222, %v222
      %v225 = vmul.f32 %v223, %v223
      %v226 = vsel %vm28, %v224, 0.0
      %227 = vadd.xlane.f32.xlu0 %v226
      %v228 = vpop.xlane.xlu0 %227
      %v229 = vsel %vm28, %v225, 0.0
      %230 = vadd.xlane.f32.xlu0 %v229
      %v231 = vpop.xlane.xlu0 %230
      %v232 = vmul.f32 %v228, %v219
      %v233 = vmul.f32 %v231, %v219
      %v234 = vadd.f32 %v232, 1e-05
      %v235 = vadd.f32 %v233, 1e-05
      %v236 = vrsqrt.pop %v234
      %v237 = vrsqrt.pop %v235
      %v238 = vmul.f32 %v222, %v236
      %v239 = vmul.f32 %v223, %v237
      %240 = vst.msk [vmem:[#allocation3] sm:$0xff] %vm28, %v238
      %241 = vst.msk [vmem:[#allocation3 + $0x8] sm:$0xff] %vm28, %v239
    $region21: #{tpu_custom_call.1} parent=1 // pred_fallthru
      _
    // Predicated region
    $region22: #{tpu_custom_call.1} parent=1 // pred_check
      _
    $region23: #{tpu_custom_call.1} parent=1 // pred_check_branch
      %243 = sbr.rel (0) target = $region25
    $region24: #{tpu_custom_call.1} parent=1 // pred_region
      %s245 = ssub.s32 256, 256
      %246 = vsyncadd [#allocation4], %s245
      %s247 = sshll.u32 [#allocation3], 4
      %s248 = int_to_ptr.vmem [resolvable:$true] %s247
      %253 = dma.vmem_to_hbm [thread:$0]  %s248, 256, %s3, [#allocation4], 128, 128, 8
    $region25: #{tpu_custom_call.1} parent=1 // pred_fallthru
      _
    // Predicated region
    $region26: #{tpu_custom_call.1} parent=1 // pred_check
      _
    $region27: #{tpu_custom_call.1} parent=1 // pred_check_branch
      %255 = sbr.rel (0) target = $region29
    $region28: #{tpu_custom_call.1} parent=1 // pred_region
      %256 = dma.done [#allocation4], 256
    $region29: #{tpu_custom_call.1} parent=1 // pred_fallthru
      _
    %257 = vsyncpa [#allocation4], 1

</llo_original>
